<compile_context>
chip_gen: v7x
topology: tpu7x:2x2x1
jax: 0.10.0
libtpu: 0.0.40
codegen_flags: <defaults>
</compile_context>

<pallas_src>
from functools import partial

import jax
import jax.numpy as jnp
from jax import lax
from jax.experimental import pallas as pl
from jax.experimental.pallas import tpu as pltpu


def _conv_bn_relu_kernel(x_ref, w_ref, bias_ref, o_ref, *, KH, stride, Ho):
    # x_ref:    (1, Hp, Wp*Cin)        bf16  zero-padded input (channels-last, W/C merged)
    # w_ref:    (KH, Wp*Cin, Wo*Cout)  bf16  banded conv weight, BN scale folded in
    # bias_ref: (1, Wo*Cout)           f32   folded BN bias, tiled over Wo (lane-dense)
    # o_ref:    (1, Ho, Wo*Cout)       f32   lane-dense output
    x = x_ref[0]                                        # (Hp, Wp*Cin)
    K = x.shape[1]

    def tap(kh):
        # Rows of the padded input feeding output rows [0, Ho) for kernel row kh.
        # Slice only along the sublane axis; lane axis stays full-width.
        return lax.slice(x, (kh, 0), (kh + (Ho - 1) * stride + 1, K), (stride, 1))

    acc = jnp.dot(tap(0), w_ref[0], preferred_element_type=jnp.float32)
    for kh in range(1, KH):                             # static unroll over KH taps
        acc = acc + jnp.dot(tap(kh), w_ref[kh],
                            preferred_element_type=jnp.float32)

    # BN (scale already folded into weights) + bias + ReLU on lane-dense data.
    out = jnp.maximum(acc + bias_ref[...], 0.0)         # (Ho, Wo*Cout) f32
    o_ref[0] = out.astype(o_ref.dtype)


def _banded_weight(w_scaled, Wp, Wo, stride):
    """(KH, KW, Cin, Cout) -> (KH, Wp*Cin, Wo*Cout) banded matmul weight.

    band[kh, w*Cin + ci, wo*Cout + co] = w_scaled[kh, w - wo*stride, ci, co]
    when 0 <= w - wo*stride < KW, else 0.
    """
    KH, KW, Cin, Cout = w_scaled.shape
    w_idx = jnp.arange(Wp)
    wo_idx = jnp.arange(Wo)
    kw_rel = w_idx[:, None] - wo_idx[None, :] * stride            # (Wp, Wo)
    valid = (kw_rel >= 0) & (kw_rel < KW)
    kw_c = jnp.clip(kw_rel, 0, KW - 1)
    wg = w_scaled[:, kw_c]                                        # (KH, Wp, Wo, Cin, Cout)
    wg = jnp.where(valid[None, :, :, None, None], wg, 0.0)
    wg = jnp.transpose(wg, (0, 1, 3, 2, 4))                       # (KH, Wp, Cin, Wo, Cout)
    return wg.reshape(KH, Wp * Cin, Wo * Cout)


def conv_bn_relu(x_nchw, weight_oihw, gamma, beta, running_mean, running_var,
                 *, stride, padding, eps=1e-5):
    """Forward of ConvBnReluLayer (eval-mode BN). PyTorch NCHW in / NCHW out."""
    N, Cin, H, W = x_nchw.shape
    Cout, _, KH, KW = weight_oihw.shape
    Ho = (H + 2 * padding - KH) // stride + 1
    Wo = (W + 2 * padding - KW) // stride + 1
    Hp, Wp = H + 2 * padding, W + 2 * padding

    # ---- wrapper-side layout plumbing + BN folding (plain XLA ops) ----
    x = jnp.transpose(x_nchw, (0, 2, 3, 1)).astype(jnp.float32)          # NHWC
    x = jnp.pad(x, ((0, 0), (padding, padding), (padding, padding), (0, 0)))
    x2d = x.reshape(N, Hp, Wp * Cin).astype(jnp.bfloat16)                # lane axis = Wp*Cin

    inv_std = 1.0 / jnp.sqrt(running_var.astype(jnp.float32) + eps)
    scale = gamma.astype(jnp.float32) * inv_std                          # (Cout,)
    bias = beta.astype(jnp.float32) - running_mean.astype(jnp.float32) * scale

    w = jnp.transpose(weight_oihw, (2, 3, 1, 0)).astype(jnp.float32)     # (KH,KW,Cin,Cout)
    w_scaled = (w * scale[None, None, None, :]).astype(jnp.bfloat16)     # fold BN scale
    w_band = _banded_weight(w_scaled, Wp, Wo, stride)                    # (KH, Wp*Cin, Wo*Cout)
    bias_tiled = jnp.tile(bias, (Wo,)).reshape(1, Wo * Cout)             # lane-dense bias

    kernel = partial(_conv_bn_relu_kernel, KH=KH, stride=stride, Ho=Ho)

    flops = 2 * N * Ho * Wo * KH * KW * Cin * Cout
    bytes_accessed = (x2d.size * 2 + w_band.size * 2
                      + bias_tiled.size * 4 + N * Ho * Wo * Cout * 4)

    out = pl.pallas_call(
        kernel,
        out_shape=jax.ShapeDtypeStruct((N, Ho, Wo * Cout), jnp.float32),
        grid=(N,),
        in_specs=[
            pl.BlockSpec((1, Hp, Wp * Cin), lambda n: (n, 0, 0)),
            pl.BlockSpec((KH, Wp * Cin, Wo * Cout), lambda n: (0, 0, 0)),
            pl.BlockSpec((1, Wo * Cout), lambda n: (0, 0)),
        ],
        out_specs=pl.BlockSpec((1, Ho, Wo * Cout), lambda n: (n, 0, 0)),
        compiler_params=pltpu.CompilerParams(
            dimension_semantics=("parallel",)),
        cost_estimate=pl.CostEstimate(flops=flops, transcendentals=0,
                                      bytes_accessed=bytes_accessed),
    )(x2d, w_band, bias_tiled)

    out = out.reshape(N, Ho, Wo, Cout)
    return jnp.transpose(out, (0, 3, 1, 2))                              # NCHW


def _reference(x_nchw, weight_oihw, gamma, beta, running_mean, running_var,
               *, stride, padding, eps=1e-5):
    """Pure-JAX f32 reference (conv + eval-mode BN + ReLU)."""
    conv = lax.conv_general_dilated(
        x_nchw.astype(jnp.float32), weight_oihw.astype(jnp.float32),
        window_strides=(stride, stride),
        padding=((padding, padding), (padding, padding)),
        dimension_numbers=("NCHW", "OIHW", "NCHW"))
    inv_std = 1.0 / jnp.sqrt(running_var + eps)
    scale = (gamma * inv_std).reshape(1, -1, 1, 1)
    bias = (beta - running_mean * gamma * inv_std).reshape(1, -1, 1, 1)
    return jnp.maximum(conv * scale + bias, 0.0)


def _reference_bf16(x_nchw, weight_oihw, gamma, beta, running_mean, running_var,
                    *, stride, padding, eps=1e-5):
    """Reference matching the kernel's numerics: bf16-rounded operands, f32 accum."""
    inv_std = 1.0 / jnp.sqrt(running_var + eps)
    scale = gamma * inv_std
    bias = beta - running_mean * scale
    w_scaled = weight_oihw * scale[:, None, None, None]
    x_b = x_nchw.astype(jnp.bfloat16).astype(jnp.float32)
    w_b = w_scaled.astype(jnp.bfloat16).astype(jnp.float32)
    conv = lax.conv_general_dilated(
        x_b, w_b, window_strides=(stride, stride),
        padding=((padding, padding), (padding, padding)),
        dimension_numbers=("NCHW", "OIHW", "NCHW"))
    return jnp.maximum(conv + bias.reshape(1, -1, 1, 1), 0.0)


if __name__ == "__main__":
    # Module config: ConvBnReluLayer(inplanes=4, planes=8, kernel_size=3,
    #                                padding=1, stride=1, bias=False)
    N, Cin, H, W = 2, 4, 16, 16
    Cout, K, padding, stride = 8, 3, 1, 1

    key = jax.random.PRNGKey(0)
    kx, kw = jax.random.split(key)

    x = jax.random.normal(kx, (N, Cin, H, W), dtype=jnp.float32)
    weight = jax.random.normal(kw, (Cout, Cin, K, K), dtype=jnp.float32) * 0.1

    # Deterministic BatchNorm2d parameters / running stats.
    gamma = jnp.linspace(0.5, 1.5, Cout, dtype=jnp.float32)
    beta = jnp.linspace(-0.2, 0.2, Cout, dtype=jnp.float32)
    running_mean = jnp.linspace(-0.1, 0.1, Cout, dtype=jnp.float32)
    running_var = jnp.linspace(0.8, 1.2, Cout, dtype=jnp.float32)

    out = conv_bn_relu(x, weight, gamma, beta, running_mean, running_var,
                       stride=stride, padding=padding)
    out = jax.block_until_ready(out)

    ref32 = _reference(x, weight, gamma, beta, running_mean, running_var,
                       stride=stride, padding=padding)
    refbf = _reference_bf16(x, weight, gamma, beta, running_mean, running_var,
                            stride=stride, padding=padding)

    assert out.shape == (N, Cout, H, W), out.shape
    # Exact semantics check vs a reference using the same bf16-rounded operands.
    assert jnp.allclose(out, refbf, atol=1e-3, rtol=1e-3), \
        float(jnp.max(jnp.abs(out - refbf)))
    # Loose check vs the full-f32 PyTorch-equivalent reference (bf16 MXU rounding).
    assert jnp.allclose(out, ref32, atol=3e-2, rtol=3e-2), \
        float(jnp.max(jnp.abs(out - ref32)))

    print("KERNEL_OK")
</pallas_src>

<mosaic_0001>
module attributes {stable_mosaic.version = 11 : i64} {
  func.func @_conv_bn_relu_kernel(%arg0: i32, %arg1: memref<1x18x72xbf16, #tpu.memory_space<vmem>>, %arg2: memref<3x72x128xbf16, #tpu.memory_space<vmem>>, %arg3: memref<1x128xf32, #tpu.memory_space<vmem>>, %arg4: memref<1x16x128xf32, #tpu.memory_space<vmem>>) attributes {dimension_semantics = [#tpu.dimension_semantics<parallel>], iteration_bounds = array<i64: 2>, scalar_prefetch = 0 : i64, scratch_operands = 0 : i64, tpu.core_type = #tpu.core_type<tc>, window_params = [{transform_indices = @transform_0, window_bounds = array<i64: 1, 18, 72>}, {pipeline_mode = #tpu.pipeline_mode<synchronous>, transform_indices = @transform_1, window_bounds = array<i64: 3, 72, 128>}, {pipeline_mode = #tpu.pipeline_mode<synchronous>, transform_indices = @transform_2, window_bounds = array<i64: 1, 128>}, {transform_indices = @transform_3, window_bounds = array<i64: 1, 16, 128>}]} {
    %c0 = arith.constant 0 : index
    %c0_0 = arith.constant 0 : index
    %c0_1 = arith.constant 0 : index
    %0 = vector.load %arg1[%c0, %c0_0, %c0_1] : memref<1x18x72xbf16, #tpu.memory_space<vmem>>, vector<1x18x72xbf16>
    %1 = vector.shape_cast %0 : vector<1x18x72xbf16> to vector<18x72xbf16>
    %2 = vector.extract_strided_slice %1 {offsets = [0, 0], sizes = [16, 72], strides = [1, 1]} : vector<18x72xbf16> to vector<16x72xbf16>
    %c0_2 = arith.constant 0 : index
    %c0_3 = arith.constant 0 : index
    %c0_4 = arith.constant 0 : index
    %3 = vector.load %arg2[%c0_2, %c0_3, %c0_4] : memref<3x72x128xbf16, #tpu.memory_space<vmem>>, vector<1x72x128xbf16>
    %4 = vector.shape_cast %3 : vector<1x72x128xbf16> to vector<72x128xbf16>
    %cst = arith.constant dense<0.000000e+00> : vector<16x128xf32>
    %5 = tpu.matmul %2, %4, %cst {dimension_numbers = #tpu.dot_dimension_numbers<[1], [0], [0], [1], [0, 0, 1, 1], [], []>} : vector<16x72xbf16>, vector<72x128xbf16>, vector<16x128xf32> -> vector<16x128xf32>
    %6 = vector.extract_strided_slice %1 {offsets = [1, 0], sizes = [16, 72], strides = [1, 1]} : vector<18x72xbf16> to vector<16x72xbf16>
    %c1 = arith.constant 1 : index
    %c0_5 = arith.constant 0 : index
    %c0_6 = arith.constant 0 : index
    %7 = vector.load %arg2[%c1, %c0_5, %c0_6] : memref<3x72x128xbf16, #tpu.memory_space<vmem>>, vector<1x72x128xbf16>
    %8 = vector.shape_cast %7 : vector<1x72x128xbf16> to vector<72x128xbf16>
    %cst_7 = arith.constant dense<0.000000e+00> : vector<16x128xf32>
    %9 = tpu.matmul %6, %8, %cst_7 {dimension_numbers = #tpu.dot_dimension_numbers<[1], [0], [0], [1], [0, 0, 1, 1], [], []>} : vector<16x72xbf16>, vector<72x128xbf16>, vector<16x128xf32> -> vector<16x128xf32>
    %10 = arith.addf %5, %9 : vector<16x128xf32>
    %11 = vector.extract_strided_slice %1 {offsets = [2, 0], sizes = [16, 72], strides = [1, 1]} : vector<18x72xbf16> to vector<16x72xbf16>
    %c2 = arith.constant 2 : index
    %c0_8 = arith.constant 0 : index
    %c0_9 = arith.constant 0 : index
    %12 = vector.load %arg2[%c2, %c0_8, %c0_9] : memref<3x72x128xbf16, #tpu.memory_space<vmem>>, vector<1x72x128xbf16>
    %13 = vector.shape_cast %12 : vector<1x72x128xbf16> to vector<72x128xbf16>
    %cst_10 = arith.constant dense<0.000000e+00> : vector<16x128xf32>
    %14 = tpu.matmul %11, %13, %cst_10 {dimension_numbers = #tpu.dot_dimension_numbers<[1], [0], [0], [1], [0, 0, 1, 1], [], []>} : vector<16x72xbf16>, vector<72x128xbf16>, vector<16x128xf32> -> vector<16x128xf32>
    %15 = arith.addf %10, %14 : vector<16x128xf32>
    %c0_11 = arith.constant 0 : index
    %c0_12 = arith.constant 0 : index
    %16 = vector.load %arg3[%c0_11, %c0_12] : memref<1x128xf32, #tpu.memory_space<vmem>>, vector<1x128xf32>
    %17 = vector.broadcast %16 : vector<1x128xf32> to vector<16x128xf32>
    %18 = arith.addf %15, %17 : vector<16x128xf32>
    %cst_13 = arith.constant 0.000000e+00 : f32
    %19 = vector.broadcast %cst_13 : f32 to vector<16x128xf32>
    %20 = arith.maximumf %18, %19 : vector<16x128xf32>
    %c0_14 = arith.constant 0 : index
    %c0_15 = arith.constant 0 : index
    %c0_16 = arith.constant 0 : index
    %21 = vector.load %arg4[%c0_14, %c0_15, %c0_16] : memref<1x16x128xf32, #tpu.memory_space<vmem>>, vector<1x16x128xf32>
    %22 = vector.shape_cast %21 : vector<1x16x128xf32> to vector<16x128xf32>
    %23 = vector.shape_cast %20 : vector<16x128xf32> to vector<1x16x128xf32>
    tpu.vector_store %arg4[%c0_14, %c0_15, %c0_16], %23 {strides = array<i32>} : memref<1x16x128xf32, #tpu.memory_space<vmem>>, vector<1x16x128xf32>,
    return
  }
  func.func @transform_0(%arg0: i32) -> (i32, i32, i32) {
    %c0_i32 = arith.constant 0 : i32
    %c0_i32_0 = arith.constant 0 : i32
    %c0_i32_1 = arith.constant 0 : i32
    return %arg0, %c0_i32, %c0_i32_0 : i32, i32, i32
  }
  func.func @transform_1(%arg0: i32) -> (i32, i32, i32) {
    %c0_i32 = arith.constant 0 : i32
    %c0_i32_0 = arith.constant 0 : i32
    %c0_i32_1 = arith.constant 0 : i32
    %c0_i32_2 = arith.constant 0 : i32
    return %c0_i32, %c0_i32_0, %c0_i32_1 : i32, i32, i32
  }
  func.func @transform_2(%arg0: i32) -> (i32, i32) {
    %c0_i32 = arith.constant 0 : i32
    %c0_i32_0 = arith.constant 0 : i32
    %c0_i32_1 = arith.constant 0 : i32
    return %c0_i32, %c0_i32_0 : i32, i32
  }
  func.func @transform_3(%arg0: i32) -> (i32, i32, i32) {
    %c0_i32 = arith.constant 0 : i32
    %c0_i32_0 = arith.constant 0 : i32
    %c0_i32_1 = arith.constant 0 : i32
    return %arg0, %c0_i32, %c0_i32_0 : i32, i32, i32
  }
}

</mosaic_0001>

<llo_original>
// kernel: tpu_custom_call.1
$region0: #{tpu_custom_call.1}
  #allocation0 [shape = 'u32[]', space=smem, size = 0x4, offset = 0x4, fixed_abs, tag = 'smem constant byte address 0x4 - core index']
  #allocation1 [shape = 'u32[144,128]{1,0:T(1,128)}', space=vmem, size = 0x12000, scoped, tag = 'internal scratch']
  %s0 = inlined_call_operand.vmem [shape: bf16[2,18,72], index: 0, kind: input, shape index: {}]
  %s1 = inlined_call_operand.hbm [shape: bf16[3,72,128], index: 1, kind: input, shape index: {}]
  %s2 = inlined_call_operand.vmem [shape: f32[1,128], index: 2, kind: input, shape index: {}]
  %s3 = inlined_call_operand.hbm [shape: f32[2,16,128], index: 3, kind: output, shape index: {}]
  %s4 = sld [smem:[#allocation0]]
  $region49: #{tpu_custom_call.1} parent=0
    _
  %s6 = ssub.s32 1, %s4
  %s7 = scalar_select 0, %s6, %s4
  $region1: #{tpu_custom_call.1} parent=0
    #allocation2 [shape = 'u8[55296]{0}', space=vmem, size = 0xd800, scoped, tag = 'input window, operand 1, single buffered']
    #allocation3 [shape = 's32[2]{0}', space=sflag, size = 0x8, scoped, tag = 'scoped memory for tpu_custom_call.1']
    #allocation4 [shape = 's32[2]{0}', space=sflag, size = 0x8, scoped, tag = 'scoped memory for tpu_custom_call.1']
    #allocation5 [shape = 'u8[16384]{0}', space=vmem, size = 0x4000, scoped, tag = 'output window, operand 0']
    %8 = vsyncpa [#allocation3], 0
    %9 = vsyncpa [#allocation4], 0
    %s10 = scalar_lea.sflag [#allocation4], 1
    %11 = vsyncpa %s10, 0
    loop: start=0, step=1, limit=4
    $region2: #{tpu_custom_call.1} parent=1 // loop_pre_header
      _
    $region3: #{tpu_custom_call.1} parent=1 // loop_header
      %s13 = sphi 0, %s17
      %p14 = scmp.ge.s32.totalorder %s13, 4
      %s23 = sphi 0, %s25
      %s26 = sphi 0, %s23
      %s27 = sphi 0, %s26
      %s43 = sphi 0, %s27
      %s47 = sphi 0, %s47
      %s49 = sphi 0, %s47
      %s50 = sphi 0, %s49
      %s64 = sphi 0, %s50
      %s68 = sphi 0, %s68
      %s70 = sphi 0, %s68
      %s71 = sphi 0, %s70
      %s85 = sphi 0, %s71
      %s91 = sphi 0, %s93
      %s94 = sphi 0, %s91
      %s95 = sphi 0, %s94
      %s111 = sphi 0, %s95
    $region4: #{tpu_custom_call.1} parent=1 // loop_header_branch
      %16 = sbr.rel (%p14) target = $region8
    $region5: #{tpu_custom_call.1} parent=1 // loop_body
      %s18 = ssub.s32 %s13, 1
      %s19 = ssub.s32 %s13, 2
      %s20 = sadd.s32 %s13, 1
      %s21 = ssub.s32 %s13, %s20
      %p22 = scmp.eq.s32.totalorder %s21, 0
      %s24 = sadd.s32 %s23, 1
      %s25 = scalar_select %p22, %s23, %s24
      %p28 = pneg %p22
      %p29 = scmp.eq.s32.totalorder %s13, 1
      %p30 = por %p28, %p29
      %p31 = scmp.ne.s32.totalorder %s23, %s26
      %p32 = scmp.eq.s32.totalorder %s13, 0
      %p33 = por %p31, %p32
      %p34 = scmp.ne.s32.totalorder %s23, %s26
      %p35 = scmp.eq.s32.totalorder %s18, 1
      %p36 = por %p34, %p35
      %p37 = scmp.ne.s32.totalorder %s26, %s27
      %p38 = scmp.eq.s32.totalorder %s18, 0
      %p39 = por %p37, %p38
      %p40 = scmp.ne.s32.totalorder %s26, %s27
      %p41 = scmp.eq.s32.totalorder %s19, 1
      %p42 = por %p40, %p41
      %p44 = scmp.ne.s32.totalorder %s27, %s43
      %p45 = scmp.eq.s32.totalorder %s19, 0
      %p46 = por %p44, %p45
      %s48 = sadd.s32 %s47, 1
      %p51 = scmp.eq.s32.totalorder %s13, 1
      %p52 = scmp.ne.s32.totalorder %s47, %s49
      %p53 = scmp.eq.s32.totalorder %s13, 0
      %p54 = por %p52, %p53
      %p55 = scmp.ne.s32.totalorder %s47, %s49
      %p56 = scmp.eq.s32.totalorder %s18, 1
      %p57 = por %p55, %p56
      %p58 = scmp.ne.s32.totalorder %s49, %s50
      %p59 = scmp.eq.s32.totalorder %s18, 0
      %p60 = por %p58, %p59
      %p61 = scmp.ne.s32.totalorder %s49, %s50
      %p62 = scmp.eq.s32.totalorder %s19, 1
      %p63 = por %p61, %p62
      %p65 = scmp.ne.s32.totalorder %s50, %s64
      %p66 = scmp.eq.s32.totalorder %s19, 0
      %p67 = por %p65, %p66
      %s69 = sadd.s32 %s68, 1
      %p72 = scmp.eq.s32.totalorder %s13, 1
      %p73 = scmp.ne.s32.totalorder %s68, %s70
      %p74 = scmp.eq.s32.totalorder %s13, 0
      %p75 = por %p73, %p74
      %p76 = scmp.ne.s32.totalorder %s68, %s70
      %p77 = scmp.eq.s32.totalorder %s18, 1
      %p78 = por %p76, %p77
      %p79 = scmp.ne.s32.totalorder %s70, %s71
      %p80 = scmp.eq.s32.totalorder %s18, 0
      %p81 = por %p79, %p80
      %p82 = scmp.ne.s32.totalorder %s70, %s71
      %p83 = scmp.eq.s32.totalorder %s19, 1
      %p84 = por %p82, %p83
      %p86 = scmp.ne.s32.totalorder %s71, %s85
      %p87 = scmp.eq.s32.totalorder %s19, 0
      %p88 = por %p86, %p87
      %s89 = ssub.s32 %s13, %s20
      %p90 = scmp.eq.s32.totalorder %s89, 0
      %s92 = sadd.s32 %s91, 1
      %s93 = scalar_select %p90, %s91, %s92
      %p96 = pneg %p90
      %p97 = scmp.eq.s32.totalorder %s13, 1
      %p98 = por %p96, %p97
      %p99 = scmp.ne.s32.totalorder %s91, %s94
      %p100 = scmp.eq.s32.totalorder %s13, 0
      %p101 = por %p99, %p100
      %p102 = scmp.ne.s32.totalorder %s91, %s94
      %p103 = scmp.eq.s32.totalorder %s18, 1
      %p104 = por %p102, %p103
      %p105 = scmp.ne.s32.totalorder %s94, %s95
      %p106 = scmp.eq.s32.totalorder %s18, 0
      %p107 = por %p105, %p106
      %p108 = scmp.ne.s32.totalorder %s94, %s95
      %p109 = scmp.eq.s32.totalorder %s19, 1
      %p110 = por %p108, %p109
      %p112 = scmp.ne.s32.totalorder %s95, %s111
      %p113 = scmp.eq.s32.totalorder %s19, 0
      %p114 = por %p112, %p113
      %p115 = scmp.le.s32.totalorder 1, %s13
      %p116 = scmp.lt.s32.totalorder %s13, 3
      %p117 = pnand %p115, %p116
      %p118 = pneg %p117
      // Predicated region
      $region9: #{tpu_custom_call.1} parent=5 // pred_check
        _
      $region10: #{tpu_custom_call.1} parent=5 // pred_check_branch
        %120 = sbr.rel (%p117) target = $region12
      $region11: #{tpu_custom_call.1} parent=5 // pred_region
        %s121 = ssub.s32 %s13, 1
        // Predicated region
        $region13: #{tpu_custom_call.1} parent=11 // pred_check
          %p122 = pneg %p60
        $region14: #{tpu_custom_call.1} parent=11 // pred_check_branch
          %124 = sbr.rel (%p122) target = $region16
        $region15: #{tpu_custom_call.1} parent=11 // pred_region
          %s126 = ssub.s32 1728, 1728
          %127 = vsyncadd [#allocation3], %s126
          %s128 = sshll.u32 [#allocation2], 4
          %s129 = int_to_ptr.vmem [resolvable:$true] %s128
          %134 = dma.hbm_to_vmem [thread:$0]  %s1, 1728, %s129, [#allocation3], 64, 64, 4
        $region16: #{tpu_custom_call.1} parent=11 // pred_fallthru
          _
        // Predicated region
        $region17: #{tpu_custom_call.1} parent=11 // pred_check
          %p135 = pneg %p81
        $region18: #{tpu_custom_call.1} parent=11 // pred_check_branch
          %137 = sbr.rel (%p135) target = $region20
        $region19: #{tpu_custom_call.1} parent=11 // pred_region
          _
        $region20: #{tpu_custom_call.1} parent=11 // pred_fallthru
          _
      $region12: #{tpu_custom_call.1} parent=5 // pred_fallthru
        _
      %p138 = scmp.lt.s32.totalorder %s13, 2
      // Predicated region
      $region21: #{tpu_custom_call.1} parent=5 // pred_check
        %p139 = pneg %p138
      $region22: #{tpu_custom_call.1} parent=5 // pred_check_branch
        %141 = sbr.rel (%p139) target = $region24
      $region23: #{tpu_custom_call.1} parent=5 // pred_region
        // Predicated region
        $region25: #{tpu_custom_call.1} parent=23 // pred_check
          %p142 = pneg %p33
        $region26: #{tpu_custom_call.1} parent=23 // pred_check_branch
          %144 = sbr.rel (%p142) target = $region28
        $region27: #{tpu_custom_call.1} parent=23 // pred_region
          %p145 = scmp.lt.s32.totalorder %s13, 1
          %s146 = scalar_select %p145, %s13, 1
          %s147 = smul.addr %s146, 3
          %s148 = smul.addr %s147, 4
          %s149 = scalar_lea.vmem %s0, %s148
        $region28: #{tpu_custom_call.1} parent=23 // pred_fallthru
          _
      $region24: #{tpu_custom_call.1} parent=5 // pred_fallthru
        _
      %p150 = scmp.le.s32.totalorder 1, %s13
      %p151 = scmp.lt.s32.totalorder %s13, 3
      %p152 = pnand %p150, %p151
      %p153 = pneg %p152
      // Predicated region
      $region29: #{tpu_custom_call.1} parent=5 // pred_check
        _
      $region30: #{tpu_custom_call.1} parent=5 // pred_check_branch
        %155 = sbr.rel (%p152) target = $region32
      $region31: #{tpu_custom_call.1} parent=5 // pred_region
        %s156 = ssub.s32 %s13, 1
        // Predicated region
        $region33: #{tpu_custom_call.1} parent=31 // pred_check
          %p157 = pneg %p60
        $region34: #{tpu_custom_call.1} parent=31 // pred_check_branch
          %159 = sbr.rel (%p157) target = $region36
        $region35: #{tpu_custom_call.1} parent=31 // pred_region
          %160 = dma.done [#allocation3], 1728
        $region36: #{tpu_custom_call.1} parent=31 // pred_fallthru
          _
        %p161 = scmp.lt.s32.totalorder %s18, 1
        %s162 = scalar_select %p161, %s18, 1
        %s163 = smul.addr %s162, 3
        %s164 = smul.addr %s163, 4
        %s165 = scalar_lea.vmem %s0, %s164
        %p166 = pneg %p39
        %p167 = pneg %p36
        %p168 = pneg %p60
        %p169 = pneg %p57
        %p170 = pneg %p81
        %p171 = pneg %p78
        %p172 = pneg %p107
        %p173 = pneg %p104
        %s174 = sand.u32 %s94, 1
        %s175 = scalar_lea.sflag [#allocation4], %s174
        %s176 = sand.u32 %s94, 1
        %s177 = smul.addr %s176, 16
        %s178 = scalar_lea.vmem [#allocation5], %s177
        %p179 = scmp.lt.s32.totalorder %s18, 1
        %s180 = scalar_select %p179, %s18, 1
        %s181 = smul.addr %s180, 3
        %s182 = smul.addr %s181, 4
        %s183 = scalar_lea.vmem %s0, %s182
        %v185 = vld [vmem:[%s183] sm:$0xf]
        %v186 = vld [vmem:[%s183 + $0x4] sm:$0xf]
        %v187 = vld [vmem:[%s183 + $0x8] sm:$0x1]
        %v188 = vld [vmem:[#allocation2] sm:$0xf]
        %v189 = vld [vmem:[#allocation2 + $0x4] sm:$0xf]
        %v190 = vld [vmem:[#allocation2 + $0x8] sm:$0xf]
        %v191 = vld [vmem:[#allocation2 + $0xc] sm:$0xf]
        %v192 = vld [vmem:[#allocation2 + $0x10] sm:$0xf]
        %v193 = vld [vmem:[#allocation2 + $0x14] sm:$0xf]
        %v194 = vld [vmem:[#allocation2 + $0x18] sm:$0xf]
        %v195 = vld [vmem:[#allocation2 + $0x1c] sm:$0xf]
        %v196 = vld [vmem:[#allocation2 + $0x20] sm:$0xf]
        %s197 = scalar_lea.vmem [#allocation2], 36
        %v198 = vld [vmem:[%s197] sm:$0xf]
        %v199 = vld [vmem:[%s197 + $0x4] sm:$0xf]
        %v200 = vld [vmem:[%s197 + $0x8] sm:$0xf]
        %v201 = vld [vmem:[%s197 + $0xc] sm:$0xf]
        %v202 = vld [vmem:[%s197 + $0x10] sm:$0xf]
        %v203 = vld [vmem:[%s197 + $0x14] sm:$0xf]
        %v204 = vld [vmem:[%s197 + $0x18] sm:$0xf]
        %v205 = vld [vmem:[%s197 + $0x1c] sm:$0xf]
        %v206 = vld [vmem:[%s197 + $0x20] sm:$0xf]
        %v210 = vunpack.c.l.b16 %v185
        %v211 = vunpack.c.l.b16 %v186
        %v212 = vunpack.c.l.b16 %v187
        %v213 = vpack.c.b16 %v211, %v210
        %v214 = vpack.c.b16 %v212, %v212
        %vm215 = vsmask.f32 7424
        %v217 = vshrl.u32 %v213, 16
        %v219 = vshll.u32 %v213, 16
        %v221 = vrot.slane %v219, 1
        %v222 = vor.u32 %v217, %v221
        %v224 = vshll.u32 %v214, 16
        %v226 = vrot.slane %v224, 1
        %v227 = vsel %vm215, %v222, %v226
        %v237 = vunpack.c.l.b16 %v198
        %v238 = vunpack.c.l.b16 %v199
        %v239 = vunpack.c.l.b16 %v200
        %v240 = vunpack.c.l.b16 %v201
        %v241 = vunpack.c.l.b16 %v202
        %v242 = vunpack.c.l.b16 %v203
        %v243 = vunpack.c.l.b16 %v204
        %v244 = vunpack.c.l.b16 %v205
        %v245 = vunpack.c.l.b16 %v206
        %v246 = vpack.c.b16 %v238, %v237
        %v247 = vpack.c.b16 %v240, %v239
        %v248 = vpack.c.b16 %v242, %v241
        %v249 = vpack.c.b16 %v244, %v243
        %v250 = vpack.c.b16 %v245, %v245
        %vm255 = vcmask 588800
        %v257 = vsel %vm255, %v227, 0
        %vm259 = vcmask 1043456
        %v261 = vsel %vm259, %v250, 0
        %263 = vmatprep.subr.bf16.mxu0 0
        %264 = vmatpush1.bf16.msra.mxu0 %v246
        %265 = vmatprep.subr.bf16.mxu0 0
        %266 = vmatpush1.bf16.msra.mxu0 %v247
        %267 = vmatprep.subr.bf16.mxu0 0
        %268 = vmatpush1.bf16.msra.mxu0 %v248
        %269 = vmatprep.subr.bf16.mxu0 0
        %270 = vmatpush1.bf16.msra.mxu0 %v249
        %271 = vmatprep.subr.bf16.mxu0 0
        %272 = vmatpush1.bf16.msra.mxu0 %v261
        %273 = vmatprep.subr.bf16.mxu0 0
        %274 = vmatpush1.bf16.msra.mxu0 0
        %275 = vmatprep.subr.bf16.mxu0 0
        %276 = vmatpush1.bf16.msra.mxu0 0
        %277 = vmatprep.subr.bf16.mxu0 0
        %278 = vmatpush1.bf16.msra.mxu0 0
        %279 = vmatprep.subr.bf16.mxu0 0
        %280 = vmatpush1.bf16.msra.mxu0 0
        %281 = vmatprep.subr.bf16.mxu0 0
        %282 = vmatpush1.bf16.msra.mxu0 0
        %283 = vmatprep.subr.bf16.mxu0 0
        %284 = vmatpush1.bf16.msra.mxu0 0
        %285 = vmatprep.subr.bf16.mxu0 0
        %286 = vmatpush1.bf16.msra.mxu0 0
        %287 = vmatprep.subr.bf16.mxu0 0
        %288 = vmatpush1.bf16.msra.mxu0 0
        %289 = vmatprep.subr.bf16.mxu0 0
        %290 = vmatpush1.bf16.msra.mxu0 0
        %291 = vmatprep.subr.bf16.mxu0 0
        %292 = vmatpush1.bf16.msra.mxu0 0
        %293 = vmatprep.subr.bf16.mxu0 0
        %294 = vmatpush1.bf16.msra.mxu0 0
        %295 = vmatprep.mubr.bf16.mxu0 0
        %296 = vmatmul.mubr.bf16.gmra.mrb[0].mxu0 %v257
        %v297 = vpop.f32.mrb[0].mxu0
        %v298 = vadd.f32 0.0, %v297
        %v299 = vpop.f32.mrb[0].mxu0
        %v300 = vpop.f32.mrb[0].mxu0
        %v301 = vadd.f32 0.0, %v300
        %v302 = vpop.f32.mrb[0].mxu0
        %303 = vdwg.mxu0
        %v313 = vunpack.c.l.b16 %v188
        %v314 = vunpack.c.l.b16 %v189
        %v315 = vunpack.c.l.b16 %v190
        %v316 = vunpack.c.l.b16 %v191
        %v317 = vunpack.c.l.b16 %v192
        %v318 = vunpack.c.l.b16 %v193
        %v319 = vunpack.c.l.b16 %v194
        %v320 = vunpack.c.l.b16 %v195
        %v321 = vunpack.c.l.b16 %v196
        %v322 = vpack.c.b16 %v314, %v313
        %v323 = vpack.c.b16 %v316, %v315
        %v324 = vpack.c.b16 %v318, %v317
        %v325 = vpack.c.b16 %v320, %v319
        %v326 = vpack.c.b16 %v321, %v321
        %v331 = vsel %vm255, %v213, 0
        %v334 = vsel %vm259, %v326, 0
        %336 = vmatprep.subr.bf16.mxu0 0
        %337 = vmatpush1.bf16.msra.mxu0 %v322
        %338 = vmatprep.subr.bf16.mxu0 0
        %339 = vmatpush1.bf16.msra.mxu0 %v323
        %340 = vmatprep.subr.bf16.mxu0 0
        %341 = vmatpush1.bf16.msra.mxu0 %v324
        %342 = vmatprep.subr.bf16.mxu0 0
        %343 = vmatpush1.bf16.msra.mxu0 %v325
        %344 = vmatprep.subr.bf16.mxu0 0
        %345 = vmatpush1.bf16.msra.mxu0 %v334
        %346 = vmatprep.subr.bf16.mxu0 0
        %347 = vmatpush1.bf16.msra.mxu0 0
        %348 = vmatprep.subr.bf16.mxu0 0
        %349 = vmatpush1.bf16.msra.mxu0 0
        %350 = vmatprep.subr.bf16.mxu0 0
        %351 = vmatpush1.bf16.msra.mxu0 0
        %352 = vmatprep.subr.bf16.mxu0 0
        %353 = vmatpush1.bf16.msra.mxu0 0
        %354 = vmatprep.subr.bf16.mxu0 0
        %355 = vmatpush1.bf16.msra.mxu0 0
        %356 = vmatprep.subr.bf16.mxu0 0
        %357 = vmatpush1.bf16.msra.mxu0 0
        %358 = vmatprep.subr.bf16.mxu0 0
        %359 = vmatpush1.bf16.msra.mxu0 0
        %360 = vmatprep.subr.bf16.mxu0 0
        %361 = vmatpush1.bf16.msra.mxu0 0
        %362 = vmatprep.subr.bf16.mxu0 0
        %363 = vmatpush1.bf16.msra.mxu0 0
        %364 = vmatprep.subr.bf16.mxu0 0
        %365 = vmatpush1.bf16.msra.mxu0 0
        %366 = vmatprep.subr.bf16.mxu0 0
        %367 = vmatpush1.bf16.msra.mxu0 0
        %368 = vmatprep.mubr.bf16.mxu0 0
        %369 = vmatmul.mubr.bf16.gmra.mrb[0].mxu0 %v331
        %v370 = vpop.f32.mrb[0].mxu0
        %v371 = vadd.f32 %v298, %v370
        %v372 = vpop.f32.mrb[0].mxu0
        %v373 = vpop.f32.mrb[0].mxu0
        %v374 = vadd.f32 %v301, %v373
        %v375 = vpop.f32.mrb[0].mxu0
        %376 = vdwg.mxu0
        %s377 = scalar_lea.vmem [#allocation2], 72
        %v378 = vld [vmem:[%s377] sm:$0xf]
        %v379 = vld [vmem:[%s377 + $0x4] sm:$0xf]
        %v380 = vld [vmem:[%s377 + $0x8] sm:$0xf]
        %v381 = vld [vmem:[%s377 + $0xc] sm:$0xf]
        %v382 = vld [vmem:[%s377 + $0x10] sm:$0xf]
        %v383 = vld [vmem:[%s377 + $0x14] sm:$0xf]
        %v384 = vld [vmem:[%s377 + $0x18] sm:$0xf]
        %v385 = vld [vmem:[%s377 + $0x1c] sm:$0xf]
        %v386 = vld [vmem:[%s377 + $0x20] sm:$0xf]
        %vm387 = vcmask 1046528
        %v388 = vrot.slane %v213, 1
        %v389 = vrot.slane %v214, 1
        %v390 = vsel %vm387, %v388, %v389
        %v400 = vunpack.c.l.b16 %v378
        %v401 = vunpack.c.l.b16 %v379
        %v402 = vunpack.c.l.b16 %v380
        %v403 = vunpack.c.l.b16 %v381
        %v404 = vunpack.c.l.b16 %v382
        %v405 = vunpack.c.l.b16 %v383
        %v406 = vunpack.c.l.b16 %v384
        %v407 = vunpack.c.l.b16 %v385
        %v408 = vunpack.c.l.b16 %v386
        %v409 = vpack.c.b16 %v401, %v400
        %v410 = vpack.c.b16 %v403, %v402
        %v411 = vpack.c.b16 %v405, %v404
        %v412 = vpack.c.b16 %v407, %v406
        %v413 = vpack.c.b16 %v408, %v408
        %v419 = vsel %vm255, %v390, 0
        %v422 = vsel %vm259, %v413, 0
        %424 = vmatprep.subr.bf16.mxu0 0
        %425 = vmatpush1.bf16.msra.mxu0 %v409
        %426 = vmatprep.subr.bf16.mxu0 0
        %427 = vmatpush1.bf16.msra.mxu0 %v410
        %428 = vmatprep.subr.bf16.mxu0 0
        %429 = vmatpush1.bf16.msra.mxu0 %v411
        %430 = vmatprep.subr.bf16.mxu0 0
        %431 = vmatpush1.bf16.msra.mxu0 %v412
        %432 = vmatprep.subr.bf16.mxu0 0
        %433 = vmatpush1.bf16.msra.mxu0 %v422
        %434 = vmatprep.subr.bf16.mxu0 0
        %435 = vmatpush1.bf16.msra.mxu0 0
        %436 = vmatprep.subr.bf16.mxu0 0
        %437 = vmatpush1.bf16.msra.mxu0 0
        %438 = vmatprep.subr.bf16.mxu0 0
        %439 = vmatpush1.bf16.msra.mxu0 0
        %440 = vmatprep.subr.bf16.mxu0 0
        %441 = vmatpush1.bf16.msra.mxu0 0
        %442 = vmatprep.subr.bf16.mxu0 0
        %443 = vmatpush1.bf16.msra.mxu0 0
        %444 = vmatprep.subr.bf16.mxu0 0
        %445 = vmatpush1.bf16.msra.mxu0 0
        %446 = vmatprep.subr.bf16.mxu0 0
        %447 = vmatpush1.bf16.msra.mxu0 0
        %448 = vmatprep.subr.bf16.mxu0 0
        %449 = vmatpush1.bf16.msra.mxu0 0
        %450 = vmatprep.subr.bf16.mxu0 0
        %451 = vmatpush1.bf16.msra.mxu0 0
        %452 = vmatprep.subr.bf16.mxu0 0
        %453 = vmatpush1.bf16.msra.mxu0 0
        %454 = vmatprep.subr.bf16.mxu0 0
        %455 = vmatpush1.bf16.msra.mxu0 0
        %456 = vmatprep.mubr.bf16.mxu0 0
        %457 = vmatmul.mubr.bf16.gmra.mrb[0].mxu0 %v419
        %v458 = vpop.f32.mrb[0].mxu0
        %v459 = vadd.f32 0.0, %v458
        %v460 = vpop.f32.mrb[0].mxu0
        %v461 = vpop.f32.mrb[0].mxu0
        %v462 = vadd.f32 0.0, %v461
        %v463 = vpop.f32.mrb[0].mxu0
        %464 = vdwg.mxu0
        %v465 = vadd.f32 %v371, %v459
        %v466 = vadd.f32 %v374, %v462
        %v467 = vld [vmem:[%s2] sm:$0x1]
        %v469 = vlaneseq
        %v470 = vshrl.u32 %v469, 7
        %v471 = vsub.s32 0, %v470
        %v472 = vrot.slane %v467, %v471
        %v474 = vadd.f32 %v465, %v472
        %v475 = vadd.f32 %v466, %v472
        %v476 = vmax.f32 %v474, 0.0
        %v477 = vmax.f32 %v475, 0.0
        %478 = vst [vmem:[%s178] sm:$0xff] %v476
        %479 = vst [vmem:[%s178 + $0x8] sm:$0xff] %v477
        %s480 = sand.u32 %s94, 1
        %s481 = scalar_lea.sflag [#allocation4], %s480
        %s482 = sand.u32 %s94, 1
        %s483 = smul.addr %s482, 16
        %s484 = scalar_lea.vmem [#allocation5], %s483
        // Predicated region
        $region37: #{tpu_custom_call.1} parent=31 // pred_check
          %p485 = pneg %p104
        $region38: #{tpu_custom_call.1} parent=31 // pred_check_branch
          %487 = sbr.rel (%p485) target = $region40
        $region39: #{tpu_custom_call.1} parent=31 // pred_region
          %s489 = ssub.s32 256, 256
          %490 = vsyncadd %s481, %s489
          %s491 = smul.addr %s18, 2
          %s492 = smul.addr %s491, 128
          %s493 = scalar_lea.hbm %s3, %s492
          %s494 = sshll.u32 %s484, 4
          %s495 = int_to_ptr.vmem [resolvable:$true] %s494
          %500 = dma.vmem_to_hbm [thread:$0]  %s495, 256, %s493, %s481, 128, 128, 8
        $region40: #{tpu_custom_call.1} parent=31 // pred_fallthru
          _
      $region32: #{tpu_custom_call.1} parent=5 // pred_fallthru
        _
      %p501 = scmp.le.s32.totalorder 2, %s13
      // Predicated region
      $region41: #{tpu_custom_call.1} parent=5 // pred_check
        %p502 = pneg %p501
      $region42: #{tpu_custom_call.1} parent=5 // pred_check_branch
        %504 = sbr.rel (%p502) target = $region44
      $region43: #{tpu_custom_call.1} parent=5 // pred_region
        %s505 = ssub.s32 %s13, 2
        // Predicated region
        $region45: #{tpu_custom_call.1} parent=43 // pred_check
          %p506 = pneg %p110
        $region46: #{tpu_custom_call.1} parent=43 // pred_check_branch
          %508 = sbr.rel (%p506) target = $region48
        $region47: #{tpu_custom_call.1} parent=43 // pred_region
          %s509 = sand.u32 %s95, 1
          %s510 = scalar_lea.sflag [#allocation4], %s509
          %s511 = sand.u32 %s95, 1
          %s512 = smul.addr %s511, 16
          %s513 = scalar_lea.vmem [#allocation5], %s512
          %514 = dma.done %s510, 256
        $region48: #{tpu_custom_call.1} parent=43 // pred_fallthru
          _
      $region44: #{tpu_custom_call.1} parent=5 // pred_fallthru
        _
    $region6: #{tpu_custom_call.1} parent=1 // loop_footer
      %s17 = sadd.s32 1, %s13
    $region7: #{tpu_custom_call.1} parent=1 // loop_footer_branch
      %12 = sbr.rel target = $region3
    $region8: #{tpu_custom_call.1} parent=1 // loop_exit
      _
    %515 = vsyncpa [#allocation3], 1
    %s516 = scalar_lea.sflag [#allocation3], 1
    %517 = vsyncpa %s516, 1
    %518 = vsyncpa [#allocation4], 1
    %s519 = scalar_lea.sflag [#allocation4], 1
    %520 = vsyncpa %s519, 1

</llo_original>
